<compile_context>
chip_gen: v6e
topology: v6e:2x2x1
jax: 0.10.0
libtpu: 0.0.40
codegen_flags: <defaults>
</compile_context>

<pallas_src>
import jax
import jax.numpy as jnp
from jax.experimental import pallas as pl
from jax.experimental.pallas import tpu as pltpu


def _broadcast_store_kernel(slab_ref, o_ref):
    # slab_ref : (1, Ct)   lane-dense flattened slab slice (same for every batch)
    # o_ref    : (Bt, Ct)  output tile: Bt batches x Ct flattened (C*K*L) lanes
    o_ref[...] = jnp.broadcast_to(slab_ref[...], o_ref.shape)


def _vmem_capacity_bytes() -> int:
    try:
        return int(pltpu.get_tpu_info().vmem_capacity_bytes)
    except Exception:
        return 64 << 20  # conservative fallback (v7x per-TC VMEM)


def _divisors(n: int):
    return [d for d in range(1, n + 1) if n % d == 0]


def _pick_tiles(B: int, CKL: int, itemsize: int, cap_bytes: int,
                min_tile_bytes: int = 1 << 20):
    """Pick (Bt, Ct): Bt | B and (Bt % 8 == 0 or Bt == B);
                      Ct | CKL and (Ct % 128 == 0 or Ct == CKL);
       largest tile with Bt*Ct*itemsize <= cap_bytes."""
    legal_bt = sorted([d for d in _divisors(B) if d == B or d % 8 == 0], reverse=True)
    legal_ct = sorted([d for d in _divisors(CKL) if d == CKL or d % 128 == 0], reverse=True)
    for ct in legal_ct:  # prefer the full (lane-dense) row, shrink only if needed
        fitting = [bt for bt in legal_bt if bt * ct * itemsize <= cap_bytes]
        if fitting:
            bt = max(fitting)
            # Prefer >= 2 batch steps (v7x: lets both TensorCores split the HBM
            # write stream) as long as the halved tile still amortizes the
            # ~0.35 us per-grid-step overhead.
            if bt == B:
                smaller = [d for d in fitting
                           if d <= B // 2 and d * ct * itemsize >= min_tile_bytes]
                if smaller:
                    bt = max(smaller)
            return bt, ct
    # Nothing fits under the cap: smallest legal tile; vmem_limit is raised to cover it.
    return min(legal_bt), min(legal_ct)


def spatial_embedding(embed_weight: jax.Array, B: int, L: int) -> jax.Array:
    """embed_weight: (K, channel). Returns (B, channel, K, L), matching PyTorch."""
    K, C = embed_weight.shape
    dtype = embed_weight.dtype
    itemsize = jnp.dtype(dtype).itemsize
    CKL = C * K * L

    # Hoisted wrapper-side slab (tiny, built once):
    #   slab[0, c*K*L + k*L + l] = embed_weight[k, c]
    slab = jnp.repeat(jnp.transpose(embed_weight, (1, 0)), L, axis=-1).reshape(1, CKL)

    # Generation-aware sizing: double-buffered output tile kept well under VMEM.
    vmem_cap = _vmem_capacity_bytes()          # 128 MiB (v5e/v6e) / 64 MiB (v7x)
    usable = (vmem_cap * 3) // 4               # headroom for compiler scratch
    cap_bytes = usable // 3                    # per-tile cap (double-buffered + slab)
    Bt, Ct = _pick_tiles(B, CKL, itemsize, cap_bytes)

    tile_bytes = Bt * Ct * itemsize
    slab_tile_bytes = 8 * Ct * itemsize        # (1, Ct) pads to 8 sublanes
    vmem_limit = int(min(usable,
                         max(2 * tile_bytes + 2 * slab_tile_bytes + (2 << 20),
                             16 << 20)))

    out_bytes = B * CKL * itemsize

    out_flat = pl.pallas_call(
        _broadcast_store_kernel,
        out_shape=jax.ShapeDtypeStruct((B, CKL), dtype),
        grid_spec=pltpu.PrefetchScalarGridSpec(
            num_scalar_prefetch=0,
            grid=(B // Bt, CKL // Ct),
            in_specs=[
                # Constant-in-b index_map -> Pallas skips re-fetching the slab per batch step.
                pl.BlockSpec((1, Ct), lambda b, c: (0, c)),
            ],
            out_specs=pl.BlockSpec((Bt, Ct), lambda b, c: (b, c)),
        ),
        compiler_params=pltpu.CompilerParams(
            dimension_semantics=("parallel", "arbitrary"),
            vmem_limit_bytes=vmem_limit,
        ),
        cost_estimate=pl.CostEstimate(
            flops=0,
            transcendentals=0,
            bytes_accessed=out_bytes + CKL * itemsize,
        ),
    )(slab)

    # Free (contiguous) reshape back to the NCHW-style PyTorch layout.
    return out_flat.reshape(B, C, K, L)


if __name__ == "__main__":
    # Module hyper-params (small, consistent with the forward pass)
    K = 16        # number of spatial nodes
    channel = 4   # embedding dim
    B = 2         # batch
    L = 8         # sequence length

    # Deterministic "nn.Embedding(K, channel)" weight init: N(0, 1), like PyTorch default.
    key = jax.random.PRNGKey(0)
    embed_weight = jax.random.normal(key, (K, channel), dtype=jnp.float32)

    out = spatial_embedding(embed_weight, B, L)
    out = jax.block_until_ready(out)

    # Reference check in plain JAX (same semantics as the PyTorch forward).
    ref = jnp.broadcast_to(embed_weight.T[None, :, :, None], (B, channel, K, L))
    assert out.shape == (B, channel, K, L), out.shape
    assert jnp.allclose(out, ref), "mismatch vs reference"

    print("KERNEL_OK")
</pallas_src>

<mosaic_0001>
module attributes {stable_mosaic.version = 11 : i64} {
  func.func @_broadcast_store_kernel(%arg0: i32, %arg1: i32, %arg2: memref<1x512xf32, #tpu.memory_space<vmem>>, %arg3: memref<2x512xf32, #tpu.memory_space<vmem>>) attributes {dimension_semantics = [#tpu.dimension_semantics<parallel>, #tpu.dimension_semantics<arbitrary>], iteration_bounds = array<i64: 1, 1>, scalar_prefetch = 0 : i64, scratch_operands = 0 : i64, tpu.core_type = #tpu.core_type<tc>, window_params = [{transform_indices = @transform_0, window_bounds = array<i64: 1, 512>}, {transform_indices = @transform_1, window_bounds = array<i64: 2, 512>}]} {
    %c0 = arith.constant 0 : index
    %c0_0 = arith.constant 0 : index
    %0 = vector.load %arg2[%c0, %c0_0] : memref<1x512xf32, #tpu.memory_space<vmem>>, vector<1x512xf32>
    %1 = vector.shape_cast %0 : vector<1x512xf32> to vector<1x512xf32>
    %2 = vector.broadcast %1 : vector<1x512xf32> to vector<2x512xf32>
    %c0_1 = arith.constant 0 : index
    %c0_2 = arith.constant 0 : index
    %3 = vector.load %arg3[%c0_1, %c0_2] : memref<2x512xf32, #tpu.memory_space<vmem>>, vector<2x512xf32>
    tpu.vector_store %arg3[%c0_1, %c0_2], %2 {strides = array<i32>} : memref<2x512xf32, #tpu.memory_space<vmem>>, vector<2x512xf32>,
    return
  }
  func.func @transform_0(%arg0: i32, %arg1: i32) -> (i32, i32) {
    %c0_i32 = arith.constant 0 : i32
    %c0_i32_0 = arith.constant 0 : i32
    return %c0_i32, %arg1 : i32, i32
  }
  func.func @transform_1(%arg0: i32, %arg1: i32) -> (i32, i32) {
    %c0_i32 = arith.constant 0 : i32
    return %arg0, %arg1 : i32, i32
  }
}

</mosaic_0001>

<llo_original>
// kernel: tpu_custom_call.1
$region0: #{tpu_custom_call.1}
  #allocation0 [shape = 'u32[]', space=smem, size = 0x4, offset = 0x4, fixed_abs, tag = 'smem constant byte address 0x4 - core index']
  #allocation1 [shape = 'u32[144,128]{1,0:T(1,128)}', space=vmem, size = 0x12000, scoped, tag = 'internal scratch']
  %s0 = inlined_call_operand.hbm [shape: f32[1,512], index: 0, kind: input, shape index: {}]
  %s1 = inlined_call_operand.hbm [shape: f32[2,512], index: 1, kind: output, shape index: {}]
  %s2 = sld [smem:[#allocation0]]
  $region18: #{tpu_custom_call.1} parent=0
    _
  %s4 = ssub.s32 1, %s2
  %s5 = scalar_select 0, %s4, %s2
  $region1: #{tpu_custom_call.1} parent=0
    #allocation2 [shape = 'u8[2048]{0}', space=vmem, size = 0x800, scoped, tag = 'input window, operand 0, single buffered']
    #allocation3 [shape = 's32[1]{0}', space=sflag, size = 0x4, scoped, tag = 'scoped memory for tpu_custom_call.1']
    #allocation4 [shape = 's32[1]{0}', space=sflag, size = 0x4, scoped, tag = 'scoped memory for tpu_custom_call.1']
    #allocation5 [shape = 'u8[4096]{0}', space=vmem, size = 0x1000, scoped, tag = 'output window, operand 0, single buffered']
    %6 = vsyncpa [#allocation3], 0
    %7 = vsyncpa [#allocation4], 0
    // Predicated region
    $region2: #{tpu_custom_call.1} parent=1 // pred_check
      _
    $region3: #{tpu_custom_call.1} parent=1 // pred_check_branch
      %9 = sbr.rel (0) target = $region5
    $region4: #{tpu_custom_call.1} parent=1 // pred_region
      %s11 = ssub.s32 64, 64
      %12 = vsyncadd [#allocation3], %s11
      %s14 = sshll.u32 [#allocation2], 4
      %s15 = int_to_ptr.vmem [resolvable:$true] %s14
      %17 = dma.hbm_to_vmem [thread:$0]  %s0, 64, %s15, [#allocation3]
    $region5: #{tpu_custom_call.1} parent=1 // pred_fallthru
      _
    // Predicated region
    $region6: #{tpu_custom_call.1} parent=1 // pred_check
      _
    $region7: #{tpu_custom_call.1} parent=1 // pred_check_branch
      %19 = sbr.rel (0) target = $region9
    $region8: #{tpu_custom_call.1} parent=1 // pred_region
      %20 = dma.done [#allocation3], 64
    $region9: #{tpu_custom_call.1} parent=1 // pred_fallthru
      _
    %v21 = vld [vmem:[#allocation2] sm:$0xf]
    %v23 = vlaneseq
    %v24 = vshrl.u32 %v23, 7
    %v25 = vsub.s32 0, %v24
    %v26 = vrot.slane %v21, %v25
    %v27 = vlaneseq
    %v28 = vshrl.u32 %v27, 7
    %v29 = vsub.s32 1, %v28
    %v30 = vrot.slane %v21, %v29
    %v31 = vlaneseq
    %v32 = vshrl.u32 %v31, 7
    %v33 = vsub.s32 2, %v32
    %v34 = vrot.slane %v21, %v33
    %v35 = vlaneseq
    %v36 = vshrl.u32 %v35, 7
    %v37 = vsub.s32 3, %v36
    %v38 = vrot.slane %v21, %v37
    %v39 = vcombine.low %v26, %v30
    %v40 = vcombine.low %v34, %v38
    %v42 = vunpack.c.l.s4 1983009808
    %v43 = vunpack.c.0.s8 %v42
    %v44 = vlaneseq
    %v45 = vshrl.u32 %v44, 7
    %v46 = vsub.s32 %v43, %v45
    %v47 = vrot.slane %v39, %v46
    %v49 = vunpack.c.l.s4 1983009808
    %v50 = vunpack.c.0.s8 %v49
    %v51 = vlaneseq
    %v52 = vshrl.u32 %v51, 7
    %v53 = vsub.s32 %v50, %v52
    %v54 = vrot.slane %v40, %v53
    %v55 = vcombine.low %v47, %v54
    %57 = vst [vmem:[#allocation5] sm:$0xff] %v55
    // Predicated region
    $region10: #{tpu_custom_call.1} parent=1 // pred_check
      _
    $region11: #{tpu_custom_call.1} parent=1 // pred_check_branch
      %59 = sbr.rel (0) target = $region13
    $region12: #{tpu_custom_call.1} parent=1 // pred_region
      %s61 = ssub.s32 128, 128
      %62 = vsyncadd [#allocation4], %s61
      %s64 = sshll.u32 [#allocation5], 4
      %s65 = int_to_ptr.vmem [resolvable:$true] %s64
      %67 = dma.vmem_to_hbm [thread:$0]  %s65, 128, %s1, [#allocation4]
    $region13: #{tpu_custom_call.1} parent=1 // pred_fallthru
      _
    // Predicated region
    $region14: #{tpu_custom_call.1} parent=1 // pred_check
      _
    $region15: #{tpu_custom_call.1} parent=1 // pred_check_branch
      %69 = sbr.rel (0) target = $region17
    $region16: #{tpu_custom_call.1} parent=1 // pred_region
      %70 = dma.done [#allocation4], 128
    $region17: #{tpu_custom_call.1} parent=1 // pred_fallthru
      _
    %71 = vsyncpa [#allocation3], 1
    %72 = vsyncpa [#allocation4], 1

</llo_original>
